<compile_context>
chip_gen: v7x
topology: tpu7x:2x2x1
jax: 0.10.0
libtpu: 0.0.40
codegen_flags: <defaults>
</compile_context>

<pallas_src>
import functools

import jax
import jax.numpy as jnp
from jax.experimental import pallas as pl
from jax.experimental.pallas import tpu as pltpu


def _attention_kernel(q_ref, m_ref, lens_ref, wq_ref, wc_ref, *refs,
                      compute_raw_align, compute_c, approx_reciprocal):
    """One grid step handles G batches x one T-tile.

    q_ref    : [G, Tt, Qp]   query tile (padded features, compute dtype)
    m_ref    : [G, S,  Kp]   memory bank for G batches (padded, compute dtype)
    lens_ref : [G, 1, 1]     int32 source lengths
    wq_ref   : [Qp, Kp+Qp]   concat([w_in.T, wo_q.T], axis=1)   (batch-invariant)
    wc_ref   : [Kp, Qp]      w_out[:, :Kd].T (padded)           (batch-invariant)
    outputs  : attn_h [G,Tt,Qp], align_v [G,Tt,S], (align [G,Tt,S]), (c [G,Tt,Kp])
    scratch  : hq_ref [G*Tt, Qp] f32   (query @ wo_q.T parked off the vregs)
    """
    n_outs = 2 + int(compute_raw_align) + int(compute_c)
    out_refs = refs[:n_outs]
    hq_ref = refs[n_outs]
    attn_h_ref, align_v_ref = out_refs[0], out_refs[1]
    pos = 2
    align_ref = None
    if compute_raw_align:
        align_ref = out_refs[pos]
        pos += 1
    c_ref = out_refs[pos] if compute_c else None

    G, Tt, Qp = q_ref.shape
    S, Kp = m_ref.shape[1], m_ref.shape[2]

    q = q_ref[...]
    m = m_ref[...]

    # ---- fused query-side projection: ONE wide MXU matmul over G*Tt rows ----
    #   proj = q @ [w_in.T | wo_q.T]  ->  [G*Tt, Kp+Qp]  (f32 accumulation)
    q2d = q.reshape(G * Tt, Qp)
    proj = jnp.dot(q2d, wq_ref[...], preferred_element_type=jnp.float32)
    ht = proj[:, :Kp].reshape(G, Tt, Kp)          # linear_in(query)
    hq_ref[...] = proj[:, Kp:]                    # query half of linear_out, parked in VMEM

    # ---- raw scores: batched bmm [G,Tt,Kp] x [G,S,Kp] -> [G,Tt,S] ----
    # TODO(synk): if the bundle dump shows a per-step vxpose of the (S,Kp) tile, feed a
    #             pre-transposed (B,Kp,S) copy of the bank for this matmul instead.
    scores = jnp.einsum("gtk,gsk->gts", ht.astype(m.dtype), m,
                        preferred_element_type=jnp.float32)

    # ---- length masking: single select against the (G,1,1) length block ----
    # NOTE: a fully masked row (length 0) gives -inf max -> NaN softmax, matching torch.
    col = jax.lax.broadcasted_iota(jnp.int32, (G, Tt, S), 2)
    scores = jnp.where(col < lens_ref[...], scores, -jnp.inf)
    if align_ref is not None:
        align_ref[...] = scores.astype(align_ref.dtype)

    # ---- softmax over the source dimension (f32) ----
    mx = jnp.max(scores, axis=-1, keepdims=True)
    e = jnp.exp(scores - mx)
    denom = jnp.sum(e, axis=-1, keepdims=True)
    if approx_reciprocal:
        align_v = e * pl.reciprocal(denom, approx=True)   # EUP slot; ~1e-3 rel. error
    else:
        align_v = e / denom                               # exact (module-faithful)
    align_v_ref[...] = align_v.astype(align_v_ref.dtype)

    # ---- context: batched bmm [G,Tt,S] x [G,S,Kp] -> [G,Tt,Kp] ----
    c = jnp.einsum("gts,gsk->gtk", align_v.astype(m.dtype), m,
                   preferred_element_type=jnp.float32)
    if c_ref is not None:
        c_ref[...] = c.astype(c_ref.dtype)

    # ---- output projection: tanh(c @ wo_c.T + q @ wo_q.T)  (concat split algebraically)
    c2d = c.reshape(G * Tt, Kp).astype(wc_ref.dtype)
    h = jnp.dot(c2d, wc_ref[...], preferred_element_type=jnp.float32) + hq_ref[...]
    attn_h_ref[...] = jnp.tanh(h).reshape(G, Tt, Qp).astype(attn_h_ref.dtype)


def _round_up(x, m):
    return ((x + m - 1) // m) * m


def _vmem_capacity_bytes():
    """Physical VMEM of the local TPU generation; conservative 64 MiB (v7x) fallback."""
    try:
        info = pltpu.get_tpu_info()
        cap = int(getattr(info, "vmem_capacity_bytes", 0) or 0)
        if cap > 0:
            return max(min(cap, 128 << 20), 32 << 20)
    except Exception:
        pass
    return 64 << 20


def _step_vmem_bytes(G, Tt, S, Qp, Kp, in_item, compute_raw_align, compute_c):
    """Rough per-grid-step footprint: double-buffered blocks + live f32 temporaries."""
    n_score_outs = 2 if compute_raw_align else 1
    inputs = 2 * (G * Tt * Qp + G * S * Kp + G) * in_item
    weights = 2 * (Qp * (Kp + Qp) + Kp * Qp) * in_item
    outputs = 2 * (G * Tt * Qp + n_score_outs * G * Tt * S
                   + (G * Tt * Kp if compute_c else 0)) * 4
    scratch = G * Tt * Qp * 4
    temps = (3 * G * Tt * S + 2 * G * Tt * Kp + G * Tt * (Kp + Qp)) * 4
    return inputs + weights + outputs + scratch + temps


def _select_tiles(B, T, S, Qp, Kp, in_item, compute_raw_align, compute_c, budget):
    """Pick (G, Tt): keep the T-tile large, shrink the batch group first."""
    g_cands = [d for d in range(min(B, 8), 0, -1) if B % d == 0]
    tt_hi = max(8, min(256, _round_up(T, 8)))
    for Tt in range(tt_hi, 7, -8):
        for G in g_cands:
            if _step_vmem_bytes(G, Tt, S, Qp, Kp, in_item,
                                compute_raw_align, compute_c) <= budget:
                return G, Tt
    # Nothing fits: run the smallest tile and let the compiler spill.
    # TODO(synk): add an inner S-tiling grid axis with online softmax for very large S*Kp.
    return 1, 8


@functools.partial(jax.jit, static_argnames=("use_bf16", "compute_raw_align",
                                              "compute_c", "approx_reciprocal",
                                              "output_dtype"))
def global_attention(query, memory_bank, memory_lengths, w_in, w_out,
                     use_bf16=False, compute_raw_align=True, compute_c=True,
                     approx_reciprocal=False, output_dtype=jnp.float32):
    """query: [B,T,Qd] f32, memory_bank: [B,S,Kd] f32, memory_lengths: [B] int,
    w_in: [Kd,Qd], w_out: [Qd, Kd+Qd]  (PyTorch nn.Linear [out,in] convention).

    Returns (attn_h, align_vectors, align, c); align / c are None when skipped."""
    B, T, Qd = query.shape
    _, S, Kd = memory_bank.shape

    compute_dtype = jnp.bfloat16 if use_bf16 else jnp.float32
    in_item = jnp.dtype(compute_dtype).itemsize

    # Lane-dense feature padding (multiples of 128); zero padding is numerically exact.
    Qp = _round_up(Qd, 128)
    Kp = _round_up(Kd, 128)

    capacity = _vmem_capacity_bytes()
    budget = int(capacity * 0.70)         # headroom for compiler scratch / semaphores
    G, Tt = _select_tiles(B, T, S, Qp, Kp, in_item, compute_raw_align, compute_c, budget)
    Tp = _round_up(T, Tt)
    # Keep both v7x TensorCores busy: never collapse to a 1x1 grid if avoidable.
    if (B // G) * (Tp // Tt) == 1:
        if B > 1:
            G = max(d for d in range(1, G) if B % d == 0)
        elif Tp > 8:
            Tt = max(8, _round_up((Tp + 1) // 2, 8))
            Tp = _round_up(T, Tt)
    grid = (B // G, Tp // Tt)

    # Padded / pre-transposed operands (batch-invariant weights transposed ONCE).
    q_in = jnp.pad(query, ((0, 0), (0, Tp - T), (0, Qp - Qd))).astype(compute_dtype)
    m_in = jnp.pad(memory_bank, ((0, 0), (0, 0), (0, Kp - Kd))).astype(compute_dtype)
    w_in_p = jnp.pad(w_in, ((0, Kp - Kd), (0, Qp - Qd)))
    wo_q_p = jnp.pad(w_out[:, Kd:], ((0, Qp - Qd), (0, Qp - Qd)))
    wo_c_p = jnp.pad(w_out[:, :Kd], ((0, Qp - Qd), (0, Kp - Kd)))
    wq_in = jnp.concatenate([w_in_p.T, wo_q_p.T], axis=1).astype(compute_dtype)  # [Qp,Kp+Qp]
    wc_in = wo_c_p.T.astype(compute_dtype)                                        # [Kp,Qp]
    lens_in = memory_lengths.astype(jnp.int32).reshape(B, 1, 1)

    kernel = functools.partial(_attention_kernel,
                               compute_raw_align=compute_raw_align,
                               compute_c=compute_c,
                               approx_reciprocal=approx_reciprocal)

    in_specs = [
        pl.BlockSpec((G, Tt, Qp), lambda bg, tt: (bg, tt, 0)),     # query tile
        pl.BlockSpec((G, S, Kp), lambda bg, tt: (bg, 0, 0)),       # memory bank (per bg)
        pl.BlockSpec((G, 1, 1), lambda bg, tt: (bg, 0, 0)),        # lengths
        pl.BlockSpec((Qp, Kp + Qp), lambda bg, tt: (0, 0)),        # [w_in.T | wo_q.T]
        pl.BlockSpec((Kp, Qp), lambda bg, tt: (0, 0)),             # wo_c.T
    ]
    out_specs = [
        pl.BlockSpec((G, Tt, Qp), lambda bg, tt: (bg, tt, 0)),     # attn_h
        pl.BlockSpec((G, Tt, S), lambda bg, tt: (bg, tt, 0)),      # align_vectors
    ]
    out_shape = [
        jax.ShapeDtypeStruct((B, Tp, Qp), output_dtype),
        jax.ShapeDtypeStruct((B, Tp, S), output_dtype),
    ]
    if compute_raw_align:
        out_specs.append(pl.BlockSpec((G, Tt, S), lambda bg, tt: (bg, tt, 0)))
        out_shape.append(jax.ShapeDtypeStruct((B, Tp, S), jnp.float32))   # keeps -inf
    if compute_c:
        out_specs.append(pl.BlockSpec((G, Tt, Kp), lambda bg, tt: (bg, tt, 0)))
        out_shape.append(jax.ShapeDtypeStruct((B, Tp, Kp), output_dtype))

    needed = _step_vmem_bytes(G, Tt, S, Qp, Kp, in_item, compute_raw_align, compute_c)
    vmem_limit = int(min(max(needed + (8 << 20), 32 << 20), capacity - (2 << 20)))

    outs = pl.pallas_call(
        kernel,
        out_shape=tuple(out_shape),
        grid_spec=pltpu.PrefetchScalarGridSpec(
            num_scalar_prefetch=0,
            grid=grid,
            in_specs=in_specs,
            out_specs=tuple(out_specs),
            scratch_shapes=[pltpu.VMEM((G * Tt, Qp), jnp.float32)],   # parked hq
        ),
        compiler_params=pltpu.CompilerParams(
            dimension_semantics=("parallel", "parallel"),
            vmem_limit_bytes=vmem_limit),
    )(q_in, m_in, lens_in, wq_in, wc_in)

    attn_h = outs[0][:, :T, :Qd]
    align_v = outs[1][:, :T, :]
    pos = 2
    align = None
    if compute_raw_align:
        align = outs[pos][:, :T, :]
        pos += 1
    c = outs[pos][:, :T, :Kd] if compute_c else None
    return attn_h, align_v, align, c


def _reference(query, memory_bank, memory_lengths, w_in, w_out):
    """Pure-JAX replica of the PyTorch forward (use_softmax=True)."""
    B, T, Qd = query.shape
    _, S, Kd = memory_bank.shape
    ht = jnp.einsum("btq,kq->btk", query, w_in)                      # linear_in
    align = jnp.einsum("btk,bsk->bts", ht, memory_bank)              # score
    mask = jnp.arange(S)[None, None, :] < memory_lengths[:, None, None]
    align = jnp.where(mask, align, -jnp.inf)
    align_v = jax.nn.softmax(align, axis=-1)
    c = jnp.einsum("bts,bsk->btk", align_v, memory_bank)
    concat = jnp.concatenate([c, query], axis=-1)                    # [B,T,Kd+Qd]
    attn_h = jnp.tanh(jnp.einsum("btx,qx->btq", concat, w_out))      # linear_out + tanh
    return attn_h, align_v, align, c


if __name__ == "__main__":
    # Small shapes consistent with the module's forward.
    B, T, S = 2, 8, 16
    query_dim, key_dim = 32, 48

    key = jax.random.PRNGKey(0)
    k_q, k_m, k_win, k_wout = jax.random.split(key, 4)

    query = jax.random.normal(k_q, (B, T, query_dim), dtype=jnp.float32)
    memory_bank = jax.random.normal(k_m, (B, S, key_dim), dtype=jnp.float32)
    memory_lengths = jnp.array([S, 10], dtype=jnp.int32)

    # Deterministic "Linear" weights, PyTorch convention [out_features, in_features].
    w_in = (jax.random.normal(k_win, (key_dim, query_dim), dtype=jnp.float32)
            * (1.0 / jnp.sqrt(query_dim)))
    w_out = (jax.random.normal(k_wout, (query_dim, key_dim + query_dim), dtype=jnp.float32)
             * (1.0 / jnp.sqrt(key_dim + query_dim)))

    ref = _reference(query, memory_bank, memory_lengths, w_in, w_out)

    # --- default f32 path (module-faithful numerics: exact softmax divide) ---
    outs = jax.block_until_ready(
        global_attention(query, memory_bank, memory_lengths, w_in, w_out))
    attn_h, align_v, align, c = outs

    assert attn_h.shape == (B, T, query_dim)
    assert align_v.shape == (B, T, S)
    assert align.shape == (B, T, S)
    assert c.shape == (B, T, key_dim)

    # align contains -inf where masked in both implementations; compare finite entries.
    finite = jnp.isfinite(ref[2])
    assert jnp.allclose(attn_h, ref[0], atol=2e-3, rtol=2e-3)
    assert jnp.allclose(align_v, ref[1], atol=2e-3, rtol=2e-3)
    assert jnp.allclose(jnp.where(finite, align, 0.0), jnp.where(finite, ref[2], 0.0),
                        atol=2e-3, rtol=2e-3)
    assert bool(jnp.all(jnp.isneginf(align) == jnp.isneginf(ref[2])))
    assert jnp.allclose(c, ref[3], atol=2e-3, rtol=2e-3)

    # --- reduced-output path: skip the raw `align` and `c` HBM writes ---
    outs_lean = jax.block_until_ready(
        global_attention(query, memory_bank, memory_lengths, w_in, w_out,
                         compute_raw_align=False, compute_c=False))
    assert outs_lean[2] is None and outs_lean[3] is None
    assert jnp.allclose(outs_lean[0], ref[0], atol=2e-3, rtol=2e-3)
    assert jnp.allclose(outs_lean[1], ref[1], atol=2e-3, rtol=2e-3)

    # --- bf16 MXU operand path (f32 accumulation); structural / sanity checks only ---
    outs_bf16 = jax.block_until_ready(
        global_attention(query, memory_bank, memory_lengths, w_in, w_out, use_bf16=True))
    assert outs_bf16[0].shape == (B, T, query_dim)
    assert bool(jnp.all(jnp.isfinite(outs_bf16[0])))
    assert jnp.allclose(jnp.sum(outs_bf16[1], axis=-1), 1.0, atol=1e-2)

    print("KERNEL_OK")
</pallas_src>

<mosaic_0001>
module attributes {stable_mosaic.version = 11 : i64} {
  func.func @_attention_kernel(%arg0: i32, %arg1: i32, %arg2: memref<1x8x128xf32, #tpu.memory_space<vmem>>, %arg3: memref<1x16x128xf32, #tpu.memory_space<vmem>>, %arg4: memref<1x1x1xi32, #tpu.memory_space<vmem>>, %arg5: memref<128x256xf32, #tpu.memory_space<vmem>>, %arg6: memref<128x128xf32, #tpu.memory_space<vmem>>, %arg7: memref<1x8x128xf32, #tpu.memory_space<vmem>>, %arg8: memref<1x8x16xf32, #tpu.memory_space<vmem>>, %arg9: memref<1x8x16xf32, #tpu.memory_space<vmem>>, %arg10: memref<1x8x128xf32, #tpu.memory_space<vmem>>, %arg11: memref<8x128xf32, #tpu.memory_space<vmem>>) attributes {dimension_semantics = [#tpu.dimension_semantics<parallel>, #tpu.dimension_semantics<parallel>], iteration_bounds = array<i64: 2, 1>, scalar_prefetch = 0 : i64, scratch_operands = 1 : i64, tpu.core_type = #tpu.core_type<tc>, window_params = [{transform_indices = @transform_0, window_bounds = array<i64: 1, 8, 128>}, {transform_indices = @transform_1, window_bounds = array<i64: 1, 16, 128>}, {transform_indices = @transform_2, window_bounds = array<i64: 1, 1, 1>}, {pipeline_mode = #tpu.pipeline_mode<synchronous>, transform_indices = @transform_3, window_bounds = array<i64: 128, 256>}, {pipeline_mode = #tpu.pipeline_mode<synchronous>, transform_indices = @transform_4, window_bounds = array<i64: 128, 128>}, {transform_indices = @transform_5, window_bounds = array<i64: 1, 8, 128>}, {transform_indices = @transform_6, window_bounds = array<i64: 1, 8, 16>}, {transform_indices = @transform_7, window_bounds = array<i64: 1, 8, 16>}, {transform_indices = @transform_8, window_bounds = array<i64: 1, 8, 128>}]} {
    %c0 = arith.constant 0 : index
    %c0_0 = arith.constant 0 : index
    %c0_1 = arith.constant 0 : index
    %0 = vector.load %arg2[%c0, %c0_0, %c0_1] : memref<1x8x128xf32, #tpu.memory_space<vmem>>, vector<1x8x128xf32>
    %c0_2 = arith.constant 0 : index
    %c0_3 = arith.constant 0 : index
    %c0_4 = arith.constant 0 : index
    %1 = vector.load %arg3[%c0_2, %c0_3, %c0_4] : memref<1x16x128xf32, #tpu.memory_space<vmem>>, vector<1x16x128xf32>
    %2 = vector.shape_cast %0 : vector<1x8x128xf32> to vector<8x128xf32>
    %c0_5 = arith.constant 0 : index
    %c0_6 = arith.constant 0 : index
    %3 = vector.load %arg5[%c0_5, %c0_6] : memref<128x256xf32, #tpu.memory_space<vmem>>, vector<128x256xf32>
    %cst = arith.constant dense<0.000000e+00> : vector<8x256xf32>
    %4 = tpu.matmul %2, %3, %cst {dimension_numbers = #tpu.dot_dimension_numbers<[1], [0], [0], [1], [0, 0, 1, 1], [], []>} : vector<8x128xf32>, vector<128x256xf32>, vector<8x256xf32> -> vector<8x256xf32>
    %5 = vector.extract_strided_slice %4 {offsets = [0, 0], sizes = [8, 128], strides = [1, 1]} : vector<8x256xf32> to vector<8x128xf32>
    %6 = vector.shape_cast %5 : vector<8x128xf32> to vector<1x8x128xf32>
    %7 = vector.extract_strided_slice %4 {offsets = [0, 128], sizes = [8, 128], strides = [1, 1]} : vector<8x256xf32> to vector<8x128xf32>
    %c0_7 = arith.constant 0 : index
    %c0_8 = arith.constant 0 : index
    %8 = vector.load %arg11[%c0_7, %c0_8] : memref<8x128xf32, #tpu.memory_space<vmem>>, vector<8x128xf32>
    tpu.vector_store %arg11[%c0_7, %c0_8], %7 {strides = array<i32>} : memref<8x128xf32, #tpu.memory_space<vmem>>, vector<8x128xf32>,
    "tpu.trace_start"() <{level = 10 : i32, message = "gtk,gsk->gts"}> : () -> ()
    %cst_9 = arith.constant dense<0.000000e+00> : vector<1x8x16xf32>
    %9 = tpu.matmul %6, %1, %cst_9 {dimension_numbers = #tpu.dot_dimension_numbers<[2], [2], [1], [1], [0, 0, 0, 1, 1, 1], [0], [0]>} : vector<1x8x128xf32>, vector<1x16x128xf32>, vector<1x8x16xf32> -> vector<1x8x16xf32>
    "tpu.trace_stop"() : () -> ()
    %10 = tpu.iota {dimensions = array<i32: 2>} : vector<1x8x16xi32>
    %c0_10 = arith.constant 0 : index
    %c0_11 = arith.constant 0 : index
    %c0_12 = arith.constant 0 : index
    %11 = vector.load %arg4[%c0_10, %c0_11, %c0_12] : memref<1x1x1xi32, #tpu.memory_space<vmem>>, vector<1x1x1xi32>
    %12 = vector.broadcast %11 : vector<1x1x1xi32> to vector<1x8x16xi32>
    %13 = arith.cmpi slt, %10, %12 : vector<1x8x16xi32>
    %cst_13 = arith.constant 0xFF800000 : f32
    %14 = vector.broadcast %cst_13 : f32 to vector<1x8x16xf32>
    %15 = arith.select %13, %9, %14 : vector<1x8x16xi1>, vector<1x8x16xf32>
    %c0_14 = arith.constant 0 : index
    %c0_15 = arith.constant 0 : index
    %c0_16 = arith.constant 0 : index
    %16 = vector.load %arg9[%c0_14, %c0_15, %c0_16] : memref<1x8x16xf32, #tpu.memory_space<vmem>>, vector<1x8x16xf32>
    tpu.vector_store %arg9[%c0_14, %c0_15, %c0_16], %15 {strides = array<i32>} : memref<1x8x16xf32, #tpu.memory_space<vmem>>, vector<1x8x16xf32>,
    %cst_17 = arith.constant dense<0xFF800000> : vector<1x8xf32>
    %17 = vector.multi_reduction <maximumf>, %15, %cst_17 [2] : vector<1x8x16xf32> to vector<1x8xf32>
    %18 = vector.shape_cast %17 : vector<1x8xf32> to vector<1x8x1xf32>
    %19 = vector.broadcast %18 : vector<1x8x1xf32> to vector<1x8x16xf32>
    %20 = arith.subf %15, %19 : vector<1x8x16xf32>
    %21 = math.exp %20 : vector<1x8x16xf32>
    %cst_18 = arith.constant dense<0.000000e+00> : vector<1x8xf32>
    %22 = vector.multi_reduction <add>, %21, %cst_18 [2] : vector<1x8x16xf32> to vector<1x8xf32>
    %23 = vector.shape_cast %22 : vector<1x8xf32> to vector<1x8x1xf32>
    %24 = vector.broadcast %23 : vector<1x8x1xf32> to vector<1x8x16xf32>
    %25 = arith.divf %21, %24 : vector<1x8x16xf32>
    %c0_19 = arith.constant 0 : index
    %c0_20 = arith.constant 0 : index
    %c0_21 = arith.constant 0 : index
    %26 = vector.load %arg8[%c0_19, %c0_20, %c0_21] : memref<1x8x16xf32, #tpu.memory_space<vmem>>, vector<1x8x16xf32>
    tpu.vector_store %arg8[%c0_19, %c0_20, %c0_21], %25 {strides = array<i32>} : memref<1x8x16xf32, #tpu.memory_space<vmem>>, vector<1x8x16xf32>,
    "tpu.trace_start"() <{level = 10 : i32, message = "gts,gsk->gtk"}> : () -> ()
    %cst_22 = arith.constant dense<0.000000e+00> : vector<1x8x128xf32>
    %27 = tpu.matmul %25, %1, %cst_22 {dimension_numbers = #tpu.dot_dimension_numbers<[2], [1], [1], [2], [0, 0, 0, 1, 1, 2], [0], [0]>} : vector<1x8x16xf32>, vector<1x16x128xf32>, vector<1x8x128xf32> -> vector<1x8x128xf32>
    "tpu.trace_stop"() : () -> ()
    %c0_23 = arith.constant 0 : index
    %c0_24 = arith.constant 0 : index
    %c0_25 = arith.constant 0 : index
    %28 = vector.load %arg10[%c0_23, %c0_24, %c0_25] : memref<1x8x128xf32, #tpu.memory_space<vmem>>, vector<1x8x128xf32>
    tpu.vector_store %arg10[%c0_23, %c0_24, %c0_25], %27 {strides = array<i32>} : memref<1x8x128xf32, #tpu.memory_space<vmem>>, vector<1x8x128xf32>,
    %29 = vector.shape_cast %27 : vector<1x8x128xf32> to vector<8x128xf32>
    %c0_26 = arith.constant 0 : index
    %c0_27 = arith.constant 0 : index
    %30 = vector.load %arg6[%c0_26, %c0_27] : memref<128x128xf32, #tpu.memory_space<vmem>>, vector<128x128xf32>
    %cst_28 = arith.constant dense<0.000000e+00> : vector<8x128xf32>
    %31 = tpu.matmul %29, %30, %cst_28 {dimension_numbers = #tpu.dot_dimension_numbers<[1], [0], [0], [1], [0, 0, 1, 1], [], []>} : vector<8x128xf32>, vector<128x128xf32>, vector<8x128xf32> -> vector<8x128xf32>
    %c0_29 = arith.constant 0 : index
    %c0_30 = arith.constant 0 : index
    %32 = vector.load %arg11[%c0_29, %c0_30] : memref<8x128xf32, #tpu.memory_space<vmem>>, vector<8x128xf32>
    %33 = arith.addf %31, %32 : vector<8x128xf32>
    %34 = math.tanh %33 : vector<8x128xf32>
    %35 = vector.shape_cast %34 : vector<8x128xf32> to vector<1x8x128xf32>
    %c0_31 = arith.constant 0 : index
    %c0_32 = arith.constant 0 : index
    %c0_33 = arith.constant 0 : index
    %36 = vector.load %arg7[%c0_31, %c0_32, %c0_33] : memref<1x8x128xf32, #tpu.memory_space<vmem>>, vector<1x8x128xf32>
    tpu.vector_store %arg7[%c0_31, %c0_32, %c0_33], %35 {strides = array<i32>} : memref<1x8x128xf32, #tpu.memory_space<vmem>>, vector<1x8x128xf32>,
    return
  }
  func.func @transform_0(%arg0: i32, %arg1: i32) -> (i32, i32, i32) {
    %c0_i32 = arith.constant 0 : i32
    %c0_i32_0 = arith.constant 0 : i32
    return %arg0, %arg1, %c0_i32 : i32, i32, i32
  }
  func.func @transform_1(%arg0: i32, %arg1: i32) -> (i32, i32, i32) {
    %c0_i32 = arith.constant 0 : i32
    %c0_i32_0 = arith.constant 0 : i32
    %c0_i32_1 = arith.constant 0 : i32
    return %arg0, %c0_i32, %c0_i32_0 : i32, i32, i32
  }
  func.func @transform_2(%arg0: i32, %arg1: i32) -> (i32, i32, i32) {
    %c0_i32 = arith.constant 0 : i32
    %c0_i32_0 = arith.constant 0 : i32
    %c0_i32_1 = arith.constant 0 : i32
    return %arg0, %c0_i32, %c0_i32_0 : i32, i32, i32
  }
  func.func @transform_3(%arg0: i32, %arg1: i32) -> (i32, i32) {
    %c0_i32 = arith.constant 0 : i32
    %c0_i32_0 = arith.constant 0 : i32
    %c0_i32_1 = arith.constant 0 : i32
    return %c0_i32, %c0_i32_0 : i32, i32
  }
  func.func @transform_4(%arg0: i32, %arg1: i32) -> (i32, i32) {
    %c0_i32 = arith.constant 0 : i32
    %c0_i32_0 = arith.constant 0 : i32
    %c0_i32_1 = arith.constant 0 : i32
    return %c0_i32, %c0_i32_0 : i32, i32
  }
  func.func @transform_5(%arg0: i32, %arg1: i32) -> (i32, i32, i32) {
    %c0_i32 = arith.constant 0 : i32
    %c0_i32_0 = arith.constant 0 : i32
    return %arg0, %arg1, %c0_i32 : i32, i32, i32
  }
  func.func @transform_6(%arg0: i32, %arg1: i32) -> (i32, i32, i32) {
    %c0_i32 = arith.constant 0 : i32
    %c0_i32_0 = arith.constant 0 : i32
    return %arg0, %arg1, %c0_i32 : i32, i32, i32
  }
  func.func @transform_7(%arg0: i32, %arg1: i32) -> (i32, i32, i32) {
    %c0_i32 = arith.constant 0 : i32
    %c0_i32_0 = arith.constant 0 : i32
    return %arg0, %arg1, %c0_i32 : i32, i32, i32
  }
  func.func @transform_8(%arg0: i32, %arg1: i32) -> (i32, i32, i32) {
    %c0_i32 = arith.constant 0 : i32
    %c0_i32_0 = arith.constant 0 : i32
    return %arg0, %arg1, %c0_i32 : i32, i32, i32
  }
}

</mosaic_0001>

<llo_original>
// kernel: global_attention.1
$region0: #{global_attention.1}
  #allocation0 [shape = 'u32[]', space=smem, size = 0x4, offset = 0x4, fixed_abs, tag = 'smem constant byte address 0x4 - core index']
  #allocation1 [shape = 'u32[144,128]{1,0:T(1,128)}', space=vmem, size = 0x12000, scoped, tag = 'internal scratch']
  #allocation2 [shape = 'f32[8,128]{1,0:T(8,128)}', space=vmem, size = 0x1000, scoped, tag = 'scratch operand']
  %s0 = inlined_call_operand.vmem [shape: f32[2,8,128], index: 0, kind: input, shape index: {}]
  %s1 = inlined_call_operand.vmem [shape: f32[2,16,128], index: 1, kind: input, shape index: {}]
  %s2 = inlined_call_operand.vmem [shape: s32[2,1,1], index: 2, kind: input, shape index: {}]
  %s3 = inlined_call_operand.vmem [shape: f32[128,256], index: 3, kind: input, shape index: {}]
  %s4 = inlined_call_operand.vmem [shape: f32[128,128], index: 4, kind: input, shape index: {}]
  %s5 = inlined_call_operand.hbm [shape: f32[2,8,128], index: 5, kind: output, shape index: {0}]
  %s6 = inlined_call_operand.hbm [shape: f32[2,8,16], index: 6, kind: output, shape index: {1}]
  %s7 = inlined_call_operand.hbm [shape: f32[2,8,16], index: 7, kind: output, shape index: {2}]
  %s8 = inlined_call_operand.hbm [shape: f32[2,8,128], index: 8, kind: output, shape index: {3}]
  %9 = xla_tuple %s5, %s6, %s7, %s8
  %s10 = sld [smem:[#allocation0]]
  $region77: #{global_attention.1} parent=0
    _
  %s12 = ssub.s32 1, %s10
  %s13 = scalar_select 0, %s12, %s10
  $region1: #{global_attention.1} parent=0
    #allocation3 [shape = 'u8[8192]{0}', space=vmem, size = 0x2000, scoped, tag = 'output window, operand 0']
    #allocation4 [shape = 's32[2]{0}', space=sflag, size = 0x8, scoped, tag = 'scoped memory for global_attention.1']
    #allocation5 [shape = 'u8[8192]{0}', space=vmem, size = 0x2000, scoped, tag = 'output window, operand 1']
    #allocation6 [shape = 's32[2]{0}', space=sflag, size = 0x8, scoped, tag = 'scoped memory for global_attention.1']
    #allocation7 [shape = 'u8[8192]{0}', space=vmem, size = 0x2000, scoped, tag = 'output window, operand 2']
    #allocation8 [shape = 'u8[8192]{0}', space=vmem, size = 0x2000, scoped, tag = 'output window, operand 3']
    #allocation9 [shape = 's32[2]{0}', space=sflag, size = 0x8, scoped, tag = 'scoped memory for global_attention.1']
    %14 = vsyncpa [#allocation4], 0
    %s15 = scalar_lea.sflag [#allocation4], 1
    %16 = vsyncpa %s15, 0
    %17 = vsyncpa [#allocation6], 0
    %s18 = scalar_lea.sflag [#allocation6], 1
    %19 = vsyncpa %s18, 0
    %20 = vsyncpa [#allocation9], 0
    %s21 = scalar_lea.sflag [#allocation9], 1
    %22 = vsyncpa %s21, 0
    loop: start=0, step=1, limit=4
    $region2: #{global_attention.1} parent=1 // loop_pre_header
      _
    $region3: #{global_attention.1} parent=1 // loop_header
      %s24 = sphi 0, %s28
      %p25 = scmp.ge.s32.totalorder %s24, 4
      %s31 = sphi 0, %s43
      %s32 = sphi 0, %s39
      %s33 = sphi 0, %s31
      %s34 = sphi 0, %s32
      %s35 = sphi 0, %s33
      %s36 = sphi 0, %s34
      %s48 = sphi 0, %s50
      %s51 = sphi 0, %s48
      %s52 = sphi 0, %s51
      %s68 = sphi 0, %s52
      %s74 = sphi 0, %s76
      %s77 = sphi 0, %s74
      %s78 = sphi 0, %s77
      %s94 = sphi 0, %s78
      %s100 = sphi 0, %s102
      %s103 = sphi 0, %s100
      %s104 = sphi 0, %s103
      %s120 = sphi 0, %s104
      %s124 = sphi 0, %s124
      %s126 = sphi 0, %s124
      %s127 = sphi 0, %s126
      %s141 = sphi 0, %s127
      %s145 = sphi 0, %s145
      %s147 = sphi 0, %s145
      %s148 = sphi 0, %s147
      %s162 = sphi 0, %s148
      %s170 = sphi 0, %s172
      %s173 = sphi 0, %s170
      %s174 = sphi 0, %s173
      %s190 = sphi 0, %s174
      %s198 = sphi 0, %s200
      %s201 = sphi 0, %s198
      %s202 = sphi 0, %s201
      %s218 = sphi 0, %s202
      %s226 = sphi 0, %s228
      %s229 = sphi 0, %s226
      %s230 = sphi 0, %s229
      %s246 = sphi 0, %s230
      %s254 = sphi 0, %s256
      %s257 = sphi 0, %s254
      %s258 = sphi 0, %s257
      %s274 = sphi 0, %s258
    $region4: #{global_attention.1} parent=1 // loop_header_branch
      %27 = sbr.rel (%p25) target = $region8
    $region5: #{global_attention.1} parent=1 // loop_body
      %s29 = ssub.s32 %s24, 1
      %s30 = ssub.s32 %s24, 2
      %s37 = sadd.s32 1, %s32
      %p38 = scmp.ge.s32.totalorder %s37, 1
      %s39 = scalar_select %p38, 0, %s37
      %s40 = sadd.s32 1, %s31
      %s41 = scalar_select %p38, %s40, %s31
      %p42 = scmp.ge.s32.totalorder %s41, 2
      %s43 = scalar_select %p42, 0, %s41
      %s44 = ssub.s32 %s31, %s43
      %s45 = ssub.s32 %s32, %s39
      %s46 = sor.u32 %s44, %s45
      %p47 = scmp.eq.s32.totalorder %s46, 0
      %s49 = sadd.s32 %s48, 1
      %s50 = scalar_select %p47, %s48, %s49
      %p53 = pneg %p47
      %p54 = scmp.eq.s32.totalorder %s24, 1
      %p55 = por %p53, %p54
      %p56 = scmp.ne.s32.totalorder %s48, %s51
      %p57 = scmp.eq.s32.totalorder %s24, 0
      %p58 = por %p56, %p57
      %p59 = scmp.ne.s32.totalorder %s48, %s51
      %p60 = scmp.eq.s32.totalorder %s29, 1
      %p61 = por %p59, %p60
      %p62 = scmp.ne.s32.totalorder %s51, %s52
      %p63 = scmp.eq.s32.totalorder %s29, 0
      %p64 = por %p62, %p63
      %p65 = scmp.ne.s32.totalorder %s51, %s52
      %p66 = scmp.eq.s32.totalorder %s30, 1
      %p67 = por %p65, %p66
      %p69 = scmp.ne.s32.totalorder %s52, %s68
      %p70 = scmp.eq.s32.totalorder %s30, 0
      %p71 = por %p69, %p70
      %s72 = ssub.s32 %s31, %s43
      %p73 = scmp.eq.s32.totalorder %s72, 0
      %s75 = sadd.s32 %s74, 1
      %s76 = scalar_select %p73, %s74, %s75
      %p79 = pneg %p73
      %p80 = scmp.eq.s32.totalorder %s24, 1
      %p81 = por %p79, %p80
      %p82 = scmp.ne.s32.totalorder %s74, %s77
      %p83 = scmp.eq.s32.totalorder %s24, 0
      %p84 = por %p82, %p83
      %p85 = scmp.ne.s32.totalorder %s74, %s77
      %p86 = scmp.eq.s32.totalorder %s29, 1
      %p87 = por %p85, %p86
      %p88 = scmp.ne.s32.totalorder %s77, %s78
      %p89 = scmp.eq.s32.totalorder %s29, 0
      %p90 = por %p88, %p89
      %p91 = scmp.ne.s32.totalorder %s77, %s78
      %p92 = scmp.eq.s32.totalorder %s30, 1
      %p93 = por %p91, %p92
      %p95 = scmp.ne.s32.totalorder %s78, %s94
      %p96 = scmp.eq.s32.totalorder %s30, 0
      %p97 = por %p95, %p96
      %s98 = ssub.s32 %s31, %s43
      %p99 = scmp.eq.s32.totalorder %s98, 0
      %s101 = sadd.s32 %s100, 1
      %s102 = scalar_select %p99, %s100, %s101
      %p105 = pneg %p99
      %p106 = scmp.eq.s32.totalorder %s24, 1
      %p107 = por %p105, %p106
      %p108 = scmp.ne.s32.totalorder %s100, %s103
      %p109 = scmp.eq.s32.totalorder %s24, 0
      %p110 = por %p108, %p109
      %p111 = scmp.ne.s32.totalorder %s100, %s103
      %p112 = scmp.eq.s32.totalorder %s29, 1
      %p113 = por %p111, %p112
      %p114 = scmp.ne.s32.totalorder %s103, %s104
      %p115 = scmp.eq.s32.totalorder %s29, 0
      %p116 = por %p114, %p115
      %p117 = scmp.ne.s32.totalorder %s103, %s104
      %p118 = scmp.eq.s32.totalorder %s30, 1
      %p119 = por %p117, %p118
      %p121 = scmp.ne.s32.totalorder %s104, %s120
      %p122 = scmp.eq.s32.totalorder %s30, 0
      %p123 = por %p121, %p122
      %s125 = sadd.s32 %s124, 1
      %p128 = scmp.eq.s32.totalorder %s24, 1
      %p129 = scmp.ne.s32.totalorder %s124, %s126
      %p130 = scmp.eq.s32.totalorder %s24, 0
      %p131 = por %p129, %p130
      %p132 = scmp.ne.s32.totalorder %s124, %s126
      %p133 = scmp.eq.s32.totalorder %s29, 1
      %p134 = por %p132, %p133
      %p135 = scmp.ne.s32.totalorder %s126, %s127
      %p136 = scmp.eq.s32.totalorder %s29, 0
      %p137 = por %p135, %p136
      %p138 = scmp.ne.s32.totalorder %s126, %s127
      %p139 = scmp.eq.s32.totalorder %s30, 1
      %p140 = por %p138, %p139
      %p142 = scmp.ne.s32.totalorder %s127, %s141
      %p143 = scmp.eq.s32.totalorder %s30, 0
      %p144 = por %p142, %p143
      %s146 = sadd.s32 %s145, 1
      %p149 = scmp.eq.s32.totalorder %s24, 1
      %p150 = scmp.ne.s32.totalorder %s145, %s147
      %p151 = scmp.eq.s32.totalorder %s24, 0
      %p152 = por %p150, %p151
      %p153 = scmp.ne.s32.totalorder %s145, %s147
      %p154 = scmp.eq.s32.totalorder %s29, 1
      %p155 = por %p153, %p154
      %p156 = scmp.ne.s32.totalorder %s147, %s148
      %p157 = scmp.eq.s32.totalorder %s29, 0
      %p158 = por %p156, %p157
      %p159 = scmp.ne.s32.totalorder %s147, %s148
      %p160 = scmp.eq.s32.totalorder %s30, 1
      %p161 = por %p159, %p160
      %p163 = scmp.ne.s32.totalorder %s148, %s162
      %p164 = scmp.eq.s32.totalorder %s30, 0
      %p165 = por %p163, %p164
      %s166 = ssub.s32 %s31, %s43
      %s167 = ssub.s32 %s32, %s39
      %s168 = sor.u32 %s166, %s167
      %p169 = scmp.eq.s32.totalorder %s168, 0
      %s171 = sadd.s32 %s170, 1
      %s172 = scalar_select %p169, %s170, %s171
      %p175 = pneg %p169
      %p176 = scmp.eq.s32.totalorder %s24, 1
      %p177 = por %p175, %p176
      %p178 = scmp.ne.s32.totalorder %s170, %s173
      %p179 = scmp.eq.s32.totalorder %s24, 0
      %p180 = por %p178, %p179
      %p181 = scmp.ne.s32.totalorder %s170, %s173
      %p182 = scmp.eq.s32.totalorder %s29, 1
      %p183 = por %p181, %p182
      %p184 = scmp.ne.s32.totalorder %s173, %s174
      %p185 = scmp.eq.s32.totalorder %s29, 0
      %p186 = por %p184, %p185
      %p187 = scmp.ne.s32.totalorder %s173, %s174
      %p188 = scmp.eq.s32.totalorder %s30, 1
      %p189 = por %p187, %p188
      %p191 = scmp.ne.s32.totalorder %s174, %s190
      %p192 = scmp.eq.s32.totalorder %s30, 0
      %p193 = por %p191, %p192
      %s194 = ssub.s32 %s31, %s43
      %s195 = ssub.s32 %s32, %s39
      %s196 = sor.u32 %s194, %s195
      %p197 = scmp.eq.s32.totalorder %s196, 0
      %s199 = sadd.s32 %s198, 1
      %s200 = scalar_select %p197, %s198, %s199
      %p203 = pneg %p197
      %p204 = scmp.eq.s32.totalorder %s24, 1
      %p205 = por %p203, %p204
      %p206 = scmp.ne.s32.totalorder %s198, %s201
      %p207 = scmp.eq.s32.totalorder %s24, 0
      %p208 = por %p206, %p207
      %p209 = scmp.ne.s32.totalorder %s198, %s201
      %p210 = scmp.eq.s32.totalorder %s29, 1
      %p211 = por %p209, %p210
      %p212 = scmp.ne.s32.totalorder %s201, %s202
      %p213 = scmp.eq.s32.totalorder %s29, 0
      %p214 = por %p212, %p213
      %p215 = scmp.ne.s32.totalorder %s201, %s202
      %p216 = scmp.eq.s32.totalorder %s30, 1
      %p217 = por %p215, %p216
      %p219 = scmp.ne.s32.totalorder %s202, %s218
      %p220 = scmp.eq.s32.totalorder %s30, 0
      %p221 = por %p219, %p220
      %s222 = ssub.s32 %s31, %s43
      %s223 = ssub.s32 %s32, %s39
      %s224 = sor.u32 %s222, %s223
      %p225 = scmp.eq.s32.totalorder %s224, 0
      %s227 = sadd.s32 %s226, 1
      %s228 = scalar_select %p225, %s226, %s227
      %p231 = pneg %p225
      %p232 = scmp.eq.s32.totalorder %s24, 1
      %p233 = por %p231, %p232
      %p234 = scmp.ne.s32.totalorder %s226, %s229
      %p235 = scmp.eq.s32.totalorder %s24, 0
      %p236 = por %p234, %p235
      %p237 = scmp.ne.s32.totalorder %s226, %s229
      %p238 = scmp.eq.s32.totalorder %s29, 1
      %p239 = por %p237, %p238
      %p240 = scmp.ne.s32.totalorder %s229, %s230
      %p241 = scmp.eq.s32.totalorder %s29, 0
      %p242 = por %p240, %p241
      %p243 = scmp.ne.s32.totalorder %s229, %s230
      %p244 = scmp.eq.s32.totalorder %s30, 1
      %p245 = por %p243, %p244
      %p247 = scmp.ne.s32.totalorder %s230, %s246
      %p248 = scmp.eq.s32.totalorder %s30, 0
      %p249 = por %p247, %p248
      %s250 = ssub.s32 %s31, %s43
      %s251 = ssub.s32 %s32, %s39
      %s252 = sor.u32 %s250, %s251
      %p253 = scmp.eq.s32.totalorder %s252, 0
      %s255 = sadd.s32 %s254, 1
      %s256 = scalar_select %p253, %s254, %s255
      %p259 = pneg %p253
      %p260 = scmp.eq.s32.totalorder %s24, 1
      %p261 = por %p259, %p260
      %p262 = scmp.ne.s32.totalorder %s254, %s257
      %p263 = scmp.eq.s32.totalorder %s24, 0
      %p264 = por %p262, %p263
      %p265 = scmp.ne.s32.totalorder %s254, %s257
      %p266 = scmp.eq.s32.totalorder %s29, 1
      %p267 = por %p265, %p266
      %p268 = scmp.ne.s32.totalorder %s257, %s258
      %p269 = scmp.eq.s32.totalorder %s29, 0
      %p270 = por %p268, %p269
      %p271 = scmp.ne.s32.totalorder %s257, %s258
      %p272 = scmp.eq.s32.totalorder %s30, 1
      %p273 = por %p271, %p272
      %p275 = scmp.ne.s32.totalorder %s258, %s274
      %p276 = scmp.eq.s32.totalorder %s30, 0
      %p277 = por %p275, %p276
      %p278 = scmp.le.s32.totalorder 1, %s24
      %p279 = scmp.lt.s32.totalorder %s24, 3
      %p280 = pnand %p278, %p279
      %p281 = pneg %p280
      // Predicated region
      $region9: #{global_attention.1} parent=5 // pred_check
        _
      $region10: #{global_attention.1} parent=5 // pred_check_branch
        %283 = sbr.rel (%p280) target = $region12
      $region11: #{global_attention.1} parent=5 // pred_region
        %s284 = ssub.s32 %s24, 1
        // Predicated region
        $region13: #{global_attention.1} parent=11 // pred_check
          %p285 = pneg %p137
        $region14: #{global_attention.1} parent=11 // pred_check_branch
          %287 = sbr.rel (%p285) target = $region16
        $region15: #{global_attention.1} parent=11 // pred_region
          _
        $region16: #{global_attention.1} parent=11 // pred_fallthru
          _
        // Predicated region
        $region17: #{global_attention.1} parent=11 // pred_check
          %p288 = pneg %p158
        $region18: #{global_attention.1} parent=11 // pred_check_branch
          %290 = sbr.rel (%p288) target = $region20
        $region19: #{global_attention.1} parent=11 // pred_region
          _
        $region20: #{global_attention.1} parent=11 // pred_fallthru
          _
      $region12: #{global_attention.1} parent=5 // pred_fallthru
        _
      %p291 = scmp.lt.s32.totalorder %s24, 2
      // Predicated region
      $region21: #{global_attention.1} parent=5 // pred_check
        %p292 = pneg %p291
      $region22: #{global_attention.1} parent=5 // pred_check_branch
        %294 = sbr.rel (%p292) target = $region24
      $region23: #{global_attention.1} parent=5 // pred_region
        // Predicated region
        $region25: #{global_attention.1} parent=23 // pred_check
          %p295 = pneg %p58
        $region26: #{global_attention.1} parent=23 // pred_check_branch
          %297 = sbr.rel (%p295) target = $region28
        $region27: #{global_attention.1} parent=23 // pred_region
          %p298 = scmp.lt.s32.totalorder %s31, 1
          %s299 = scalar_select %p298, %s31, 1
          %p300 = scmp.lt.s32.totalorder %s32, 0
          %s301 = scalar_select %p300, %s32, 0
          %s302 = sadd.s32 %s301, %s299
          %s303 = smul.addr %s302, 8
          %s304 = scalar_lea.vmem %s0, %s303
        $region28: #{global_attention.1} parent=23 // pred_fallthru
          _
        // Predicated region
        $region29: #{global_attention.1} parent=23 // pred_check
          %p305 = pneg %p84
        $region30: #{global_attention.1} parent=23 // pred_check_branch
          %307 = sbr.rel (%p305) target = $region32
        $region31: #{global_attention.1} parent=23 // pred_region
          %p308 = scmp.lt.s32.totalorder %s31, 1
          %s309 = scalar_select %p308, %s31, 1
          %s310 = smul.addr %s309, 2
          %s311 = smul.addr %s310, 8
          %s312 = scalar_lea.vmem %s1, %s311
        $region32: #{global_attention.1} parent=23 // pred_fallthru
          _
        // Predicated region
        $region33: #{global_attention.1} parent=23 // pred_check
          %p313 = pneg %p110
        $region34: #{global_attention.1} parent=23 // pred_check_branch
          %315 = sbr.rel (%p313) target = $region36
        $region35: #{global_attention.1} parent=23 // pred_region
          %p316 = scmp.lt.s32.totalorder %s31, 1
          %s317 = scalar_select %p316, %s31, 1
          %s318 = scalar_lea.vmem %s2, %s317
        $region36: #{global_attention.1} parent=23 // pred_fallthru
          _
      $region24: #{global_attention.1} parent=5 // pred_fallthru
        _
      %p319 = scmp.le.s32.totalorder 1, %s24
      %p320 = scmp.lt.s32.totalorder %s24, 3
      %p321 = pnand %p319, %p320
      %p322 = pneg %p321
      // Predicated region
      $region37: #{global_attention.1} parent=5 // pred_check
        _
      $region38: #{global_attention.1} parent=5 // pred_check_branch
        %324 = sbr.rel (%p321) target = $region40
      $region39: #{global_attention.1} parent=5 // pred_region
        %s325 = ssub.s32 %s24, 1
        %p326 = scmp.lt.s32.totalorder %s33, 1
        %s327 = scalar_select %p326, %s33, 1
        %p328 = scmp.lt.s32.totalorder %s34, 0
        %s329 = scalar_select %p328, %s34, 0
        %s330 = sadd.s32 %s329, %s327
        %s331 = smul.addr %s330, 8
        %s332 = scalar_lea.vmem %s0, %s331
        %p333 = pneg %p64
        %p334 = pneg %p61
        %p335 = scmp.lt.s32.totalorder %s33, 1
        %s336 = scalar_select %p335, %s33, 1
        %s337 = smul.addr %s336, 2
        %s338 = smul.addr %s337, 8
        %s339 = scalar_lea.vmem %s1, %s338
        %p340 = pneg %p90
        %p341 = pneg %p87
        %p342 = scmp.lt.s32.totalorder %s33, 1
        %s343 = scalar_select %p342, %s33, 1
        %s344 = scalar_lea.vmem %s2, %s343
        %p345 = pneg %p116
        %p346 = pneg %p113
        %p347 = pneg %p137
        %p348 = pneg %p134
        %p349 = pneg %p158
        %p350 = pneg %p155
        %p351 = pneg %p186
        %p352 = pneg %p183
        %s353 = sand.u32 %s173, 1
        %s354 = scalar_lea.sflag [#allocation4], %s353
        %s355 = sand.u32 %s173, 1
        %s356 = smul.addr %s355, 8
        %s357 = scalar_lea.vmem [#allocation3], %s356
        %p358 = pneg %p214
        %p359 = pneg %p211
        %s360 = sand.u32 %s29, 1
        %s361 = scalar_lea.sflag [#allocation6], %s360
        %s362 = sand.u32 %s201, 1
        %s363 = smul.addr %s362, 8
        %s364 = scalar_lea.vmem [#allocation5], %s363
        %p365 = pneg %p242
        %p366 = pneg %p239
        %s367 = sand.u32 %s29, 1
        %s368 = scalar_lea.sflag [#allocation6], %s367
        %s369 = sand.u32 %s229, 1
        %s370 = smul.addr %s369, 8
        %s371 = scalar_lea.vmem [#allocation7], %s370
        %p372 = pneg %p270
        %p373 = pneg %p267
        %s374 = sand.u32 %s257, 1
        %s375 = scalar_lea.sflag [#allocation9], %s374
        %s376 = sand.u32 %s257, 1
        %s377 = smul.addr %s376, 8
        %s378 = scalar_lea.vmem [#allocation8], %s377
        %p379 = scmp.lt.s32.totalorder %s33, 1
        %s380 = scalar_select %p379, %s33, 1
        %p381 = scmp.lt.s32.totalorder %s34, 0
        %s382 = scalar_select %p381, %s34, 0
        %s383 = sadd.s32 %s382, %s380
        %s384 = smul.addr %s383, 8
        %s385 = scalar_lea.vmem %s0, %s384
        %p386 = scmp.lt.s32.totalorder %s33, 1
        %s387 = scalar_select %p386, %s33, 1
        %s388 = smul.addr %s387, 2
        %s389 = smul.addr %s388, 8
        %s390 = scalar_lea.vmem %s1, %s389
        %p391 = scmp.lt.s32.totalorder %s33, 1
        %s392 = scalar_select %p391, %s33, 1
        %s393 = scalar_lea.vmem %s2, %s392
        %v394 = vld [vmem:[%s385] sm:$0xff]
        %v395 = vld [vmem:[%s390] sm:$0xff]
        %v396 = vld [vmem:[%s390 + $0x8] sm:$0xff]
        %v397 = vld [vmem:[%s3] sm:$0xff]
        %v398 = vld [vmem:[%s3 + $0x8] sm:$0xff]
        %v399 = vld [vmem:[%s3 + $0x10] sm:$0xff]
        %v400 = vld [vmem:[%s3 + $0x18] sm:$0xff]
        %v401 = vld [vmem:[%s3 + $0x20] sm:$0xff]
        %v402 = vld [vmem:[%s3 + $0x28] sm:$0xff]
        %v403 = vld [vmem:[%s3 + $0x30] sm:$0xff]
        %v404 = vld [vmem:[%s3 + $0x38] sm:$0xff]
        %v405 = vld [vmem:[%s3 + $0x40] sm:$0xff]
        %v406 = vld [vmem:[%s3 + $0x48] sm:$0xff]
        %v407 = vld [vmem:[%s3 + $0x50] sm:$0xff]
        %v408 = vld [vmem:[%s3 + $0x58] sm:$0xff]
        %v409 = vld [vmem:[%s3 + $0x60] sm:$0xff]
        %v410 = vld [vmem:[%s3 + $0x68] sm:$0xff]
        %v411 = vld [vmem:[%s3 + $0x70] sm:$0xff]
        %v412 = vld [vmem:[%s3 + $0x78] sm:$0xff]
        %v413 = vld [vmem:[%s3 + $0x80] sm:$0xff]
        %v414 = vld [vmem:[%s3 + $0x88] sm:$0xff]
        %v415 = vld [vmem:[%s3 + $0x90] sm:$0xff]
        %v416 = vld [vmem:[%s3 + $0x98] sm:$0xff]
        %v417 = vld [vmem:[%s3 + $0xa0] sm:$0xff]
        %v418 = vld [vmem:[%s3 + $0xa8] sm:$0xff]
        %v419 = vld [vmem:[%s3 + $0xb0] sm:$0xff]
        %v420 = vld [vmem:[%s3 + $0xb8] sm:$0xff]
        %v421 = vld [vmem:[%s3 + $0xc0] sm:$0xff]
        %v422 = vld [vmem:[%s3 + $0xc8] sm:$0xff]
        %v423 = vld [vmem:[%s3 + $0xd0] sm:$0xff]
        %v424 = vld [vmem:[%s3 + $0xd8] sm:$0xff]
        %v425 = vld [vmem:[%s3 + $0xe0] sm:$0xff]
        %v426 = vld [vmem:[%s3 + $0xe8] sm:$0xff]
        %v427 = vld [vmem:[%s3 + $0xf0] sm:$0xff]
        %v428 = vld [vmem:[%s3 + $0xf8] sm:$0xff]
        %429 = vmatprep.subr.mxu0 %v398
        %430 = vmatpush1.msra.mxu0 %v397
        %431 = vmatprep.subr.mxu0 %v400
        %432 = vmatpush1.msra.mxu0 %v399
        %433 = vmatprep.subr.mxu0 %v402
        %434 = vmatpush1.msra.mxu0 %v401
        %435 = vmatprep.subr.mxu0 %v404
        %436 = vmatpush1.msra.mxu0 %v403
        %437 = vmatprep.subr.mxu0 %v406
        %438 = vmatpush1.msra.mxu0 %v405
        %439 = vmatprep.subr.mxu0 %v408
        %440 = vmatpush1.msra.mxu0 %v407
        %441 = vmatprep.subr.mxu0 %v410
        %442 = vmatpush1.msra.mxu0 %v409
        %443 = vmatprep.subr.mxu0 %v412
        %444 = vmatpush1.msra.mxu0 %v411
        %445 = vmatprep.subr.mxu0 %v414
        %446 = vmatpush1.msra.mxu0 %v413
        %447 = vmatprep.subr.mxu0 %v416
        %448 = vmatpush1.msra.mxu0 %v415
        %449 = vmatprep.subr.mxu0 %v418
        %450 = vmatpush1.msra.mxu0 %v417
        %451 = vmatprep.subr.mxu0 %v420
        %452 = vmatpush1.msra.mxu0 %v419
        %453 = vmatprep.subr.mxu0 %v422
        %454 = vmatpush1.msra.mxu0 %v421
        %455 = vmatprep.subr.mxu0 %v424
        %456 = vmatpush1.msra.mxu0 %v423
        %457 = vmatprep.subr.mxu0 %v426
        %458 = vmatpush1.msra.mxu0 %v425
        %459 = vmatprep.subr.mxu0 %v428
        %460 = vmatpush1.msra.mxu0 %v427
        %461 = vmatprep.subr.mxu0 0.0
        %462 = vmatpush1.msra.mxu0 0.0
        %463 = vmatprep.subr.mxu0 0.0
        %464 = vmatpush1.msra.mxu0 0.0
        %465 = vmatprep.subr.mxu0 0.0
        %466 = vmatpush1.msra.mxu0 0.0
        %467 = vmatprep.subr.mxu0 0.0
        %468 = vmatpush1.msra.mxu0 0.0
        %469 = vmatprep.subr.mxu0 0.0
        %470 = vmatpush1.msra.mxu0 0.0
        %471 = vmatprep.subr.mxu0 0.0
        %472 = vmatpush1.msra.mxu0 0.0
        %473 = vmatprep.subr.mxu0 0.0
        %474 = vmatpush1.msra.mxu0 0.0
        %475 = vmatprep.subr.mxu0 0.0
        %476 = vmatpush1.msra.mxu0 0.0
        %477 = vmatprep.subr.mxu0 0.0
        %478 = vmatpush1.msra.mxu0 0.0
        %479 = vmatprep.subr.mxu0 0.0
        %480 = vmatpush1.msra.mxu0 0.0
        %481 = vmatprep.subr.mxu0 0.0
        %482 = vmatpush1.msra.mxu0 0.0
        %483 = vmatprep.subr.mxu0 0.0
        %484 = vmatpush1.msra.mxu0 0.0
        %485 = vmatprep.subr.mxu0 0.0
        %486 = vmatpush1.msra.mxu0 0.0
        %487 = vmatprep.subr.mxu0 0.0
        %488 = vmatpush1.msra.mxu0 0.0
        %489 = vmatprep.subr.mxu0 0.0
        %490 = vmatpush1.msra.mxu0 0.0
        %491 = vmatprep.subr.mxu0 0.0
        %492 = vmatpush1.msra.mxu0 0.0
        %493 = vmatprep.mubr.f32.mxu0 0.0
        %494 = vmatmul.mubr.f32.gmra.mrb[0].mxu0 %v394
        %v495 = vpop.f32.mrb[0].mxu0
        %v496 = vadd.f32 0.0, %v495
        %v497 = vpop.f32.mrb[0].mxu0
        %v498 = vadd.f32 0.0, %v497
        %499 = vdwg.mxu0
        %500 = vst [vmem:[#allocation2] sm:$0xff] %v498
        %501 = vmatprep.subr.mxu0 0.0
        %502 = vmatpush1.xpose.msra.mxu0 %v395
        %503 = vmatprep.subr.mxu0 0.0
        %504 = vmatpush1.xpose.msra.mxu0 %v396
        %505 = vmatprep.subr.mxu0 0.0
        %506 = vmatpush1.xpose.msra.mxu0 0.0
        %507 = vmatprep.subr.mxu0 0.0
        %508 = vmatpush1.xpose.msra.mxu0 0.0
        %509 = vmatprep.subr.mxu0 0.0
        %510 = vmatpush1.xpose.msra.mxu0 0.0
        %511 = vmatprep.subr.mxu0 0.0
        %512 = vmatpush1.xpose.msra.mxu0 0.0
        %513 = vmatprep.subr.mxu0 0.0
        %514 = vmatpush1.xpose.msra.mxu0 0.0
        %515 = vmatprep.subr.mxu0 0.0
        %516 = vmatpush1.xpose.msra.mxu0 0.0
        %517 = vmatprep.subr.mxu0 0.0
        %518 = vmatpush1.xpose.msra.mxu0 0.0
        %519 = vmatprep.subr.mxu0 0.0
        %520 = vmatpush1.xpose.msra.mxu0 0.0
        %521 = vmatprep.subr.mxu0 0.0
        %522 = vmatpush1.xpose.msra.mxu0 0.0
        %523 = vmatprep.subr.mxu0 0.0
        %524 = vmatpush1.xpose.msra.mxu0 0.0
        %525 = vmatprep.subr.mxu0 0.0
        %526 = vmatpush1.xpose.msra.mxu0 0.0
        %527 = vmatprep.subr.mxu0 0.0
        %528 = vmatpush1.xpose.msra.mxu0 0.0
        %529 = vmatprep.subr.mxu0 0.0
        %530 = vmatpush1.xpose.msra.mxu0 0.0
        %531 = vmatprep.subr.mxu0 0.0
        %532 = vmatpush1.xpose.msra.mxu0 0.0
        %533 = vmatprep.subr.mxu0 0.0
        %534 = vmatpush1.xpose.msra.mxu0 0.0
        %535 = vmatprep.subr.mxu0 0.0
        %536 = vmatpush1.xpose.msra.mxu0 0.0
        %537 = vmatprep.subr.mxu0 0.0
        %538 = vmatpush1.xpose.msra.mxu0 0.0
        %539 = vmatprep.subr.mxu0 0.0
        %540 = vmatpush1.xpose.msra.mxu0 0.0
        %541 = vmatprep.subr.mxu0 0.0
        %542 = vmatpush1.xpose.msra.mxu0 0.0
        %543 = vmatprep.subr.mxu0 0.0
        %544 = vmatpush1.xpose.msra.mxu0 0.0
        %545 = vmatprep.subr.mxu0 0.0
        %546 = vmatpush1.xpose.msra.mxu0 0.0
        %547 = vmatprep.subr.mxu0 0.0
        %548 = vmatpush1.xpose.msra.mxu0 0.0
        %549 = vmatprep.subr.mxu0 0.0
        %550 = vmatpush1.xpose.msra.mxu0 0.0
        %551 = vmatprep.subr.mxu0 0.0
        %552 = vmatpush1.xpose.msra.mxu0 0.0
        %553 = vmatprep.subr.mxu0 0.0
        %554 = vmatpush1.xpose.msra.mxu0 0.0
        %555 = vmatprep.subr.mxu0 0.0
        %556 = vmatpush1.xpose.msra.mxu0 0.0
        %557 = vmatprep.subr.mxu0 0.0
        %558 = vmatpush1.xpose.msra.mxu0 0.0
        %559 = vmatprep.subr.mxu0 0.0
        %560 = vmatpush1.xpose.msra.mxu0 0.0
        %561 = vmatprep.subr.mxu0 0.0
        %562 = vmatpush1.xpose.msra.mxu0 0.0
        %563 = vmatprep.subr.mxu0 0.0
        %564 = vmatpush1.xpose.msra.mxu0 0.0
        %565 = vmatprep.mubr.f32.mxu0 0.0
        %566 = vmatmul.mubr.f32.gmra.mrb[0].mxu0 %v496
        %v567 = vpop.f32.mrb[0].mxu0
        %v568 = vadd.f32 0.0, %v567
        %v569 = vpop.f32.mrb[0].mxu0
        %570 = vdwg.mxu0
        %v571 = vlaneseq
        %v572 = vand.u32 %v571, 127
        %v573 = vld [vmem:[%s393] sm:$0x1]
        %v574 = vlaneseq
        %v575 = vshrl.u32 %v574, 7
        %v576 = vsub.s32 0, %v575
        %v577 = vrot.slane %v573, %v576
        %578 = vset.pattern.permute.xlu0 0
        %579 = vperm.xlu0 %578, %v577
        %v580 = vpop.permute.xlu0 %579
        %vm581 = vcmp.lt.s32.totalorder %v572, %v580
        %v582 = vsel %vm581, %v568, -inf
        %vm583 = vcmask 130048
        %584 = vst.msk [vmem:[%s371] sm:$0xff] %vm583, %v582
        %v585 = vsel %vm583, %v582, -inf
        %586 = vmax.xlane.f32.xlu0 %v585
        %v587 = vpop.xlane.xlu0 %586
        %v588 = vsub.f32 %v582, %v587
        %v589 = vmul.f32 %v588, 1.442695
        %v590 = vpow.pop %v589
        %v591 = vsel %vm583, %v590, 0.0
        %592 = vadd.xlane.f32.xlu0 %v591
        %v593 = vpop.xlane.xlu0 %592
        %v594 = vrcp.pop %v593
        %v595 = vmul.f32 %v590, %v594
        %596 = vst.msk [vmem:[%s364] sm:$0xff] %vm583, %v595
        %v598 = vsel %vm583, %v595, 0
        %600 = vmatprep.subr.mxu0 0.0
        %601 = vmatpush1.msra.mxu0 %v395
        %602 = vmatprep.subr.mxu0 0.0
        %603 = vmatpush1.msra.mxu0 %v396
        %604 = vmatprep.subr.mxu0 0.0
        %605 = vmatpush1.msra.mxu0 0.0
        %606 = vmatprep.subr.mxu0 0.0
        %607 = vmatpush1.msra.mxu0 0.0
        %608 = vmatprep.subr.mxu0 0.0
        %609 = vmatpush1.msra.mxu0 0.0
        %610 = vmatprep.subr.mxu0 0.0
        %611 = vmatpush1.msra.mxu0 0.0
        %612 = vmatprep.subr.mxu0 0.0
        %613 = vmatpush1.msra.mxu0 0.0
        %614 = vmatprep.subr.mxu0 0.0
        %615 = vmatpush1.msra.mxu0 0.0
        %616 = vmatprep.subr.mxu0 0.0
        %617 = vmatpush1.msra.mxu0 0.0
        %618 = vmatprep.subr.mxu0 0.0
        %619 = vmatpush1.msra.mxu0 0.0
        %620 = vmatprep.subr.mxu0 0.0
        %621 = vmatpush1.msra.mxu0 0.0
        %622 = vmatprep.subr.mxu0 0.0
        %623 = vmatpush1.msra.mxu0 0.0
        %624 = vmatprep.subr.mxu0 0.0
        %625 = vmatpush1.msra.mxu0 0.0
        %626 = vmatprep.subr.mxu0 0.0
        %627 = vmatpush1.msra.mxu0 0.0
        %628 = vmatprep.subr.mxu0 0.0
        %629 = vmatpush1.msra.mxu0 0.0
        %630 = vmatprep.subr.mxu0 0.0
        %631 = vmatpush1.msra.mxu0 0.0
        %632 = vmatprep.subr.mxu0 0.0
        %633 = vmatpush1.msra.mxu0 0.0
        %634 = vmatprep.subr.mxu0 0.0
        %635 = vmatpush1.msra.mxu0 0.0
        %636 = vmatprep.subr.mxu0 0.0
        %637 = vmatpush1.msra.mxu0 0.0
        %638 = vmatprep.subr.mxu0 0.0
        %639 = vmatpush1.msra.mxu0 0.0
        %640 = vmatprep.subr.mxu0 0.0
        %641 = vmatpush1.msra.mxu0 0.0
        %642 = vmatprep.subr.mxu0 0.0
        %643 = vmatpush1.msra.mxu0 0.0
        %644 = vmatprep.subr.mxu0 0.0
        %645 = vmatpush1.msra.mxu0 0.0
        %646 = vmatprep.subr.mxu0 0.0
        %647 = vmatpush1.msra.mxu0 0.0
        %648 = vmatprep.subr.mxu0 0.0
        %649 = vmatpush1.msra.mxu0 0.0
        %650 = vmatprep.subr.mxu0 0.0
        %651 = vmatpush1.msra.mxu0 0.0
        %652 = vmatprep.subr.mxu0 0.0
        %653 = vmatpush1.msra.mxu0 0.0
        %654 = vmatprep.subr.mxu0 0.0
        %655 = vmatpush1.msra.mxu0 0.0
        %656 = vmatprep.subr.mxu0 0.0
        %657 = vmatpush1.msra.mxu0 0.0
        %658 = vmatprep.subr.mxu0 0.0
        %659 = vmatpush1.msra.mxu0 0.0
        %660 = vmatprep.subr.mxu0 0.0
        %661 = vmatpush1.msra.mxu0 0.0
        %662 = vmatprep.subr.mxu0 0.0
        %663 = vmatpush1.msra.mxu0 0.0
        %664 = vmatprep.mubr.f32.mxu0 0.0
        %665 = vmatmul.mubr.f32.gmra.mrb[0].mxu0 %v598
        %v666 = vpop.f32.mrb[0].mxu0
        %v667 = vadd.f32 0.0, %v666
        %v668 = vpop.f32.mrb[0].mxu0
        %669 = vdwg.mxu0
        %670 = vst [vmem:[%s378] sm:$0xff] %v667
        %v671 = vld [vmem:[%s4] sm:$0xff]
        %v672 = vld [vmem:[%s4 + $0x8] sm:$0xff]
        %v673 = vld [vmem:[%s4 + $0x10] sm:$0xff]
        %v674 = vld [vmem:[%s4 + $0x18] sm:$0xff]
        %v675 = vld [vmem:[%s4 + $0x20] sm:$0xff]
        %v676 = vld [vmem:[%s4 + $0x28] sm:$0xff]
        %v677 = vld [vmem:[%s4 + $0x30] sm:$0xff]
        %v678 = vld [vmem:[%s4 + $0x38] sm:$0xff]
        %v679 = vld [vmem:[%s4 + $0x40] sm:$0xff]
        %v680 = vld [vmem:[%s4 + $0x48] sm:$0xff]
        %v681 = vld [vmem:[%s4 + $0x50] sm:$0xff]
        %v682 = vld [vmem:[%s4 + $0x58] sm:$0xff]
        %v683 = vld [vmem:[%s4 + $0x60] sm:$0xff]
        %v684 = vld [vmem:[%s4 + $0x68] sm:$0xff]
        %v685 = vld [vmem:[%s4 + $0x70] sm:$0xff]
        %v686 = vld [vmem:[%s4 + $0x78] sm:$0xff]
        %v687 = vld [vmem:[#allocation2] sm:$0xff]
        %688 = vmatprep.subr.mxu0 0.0
        %689 = vmatpush1.msra.mxu0 %v671
        %690 = vmatprep.subr.mxu0 0.0
        %691 = vmatpush1.msra.mxu0 %v672
        %692 = vmatprep.subr.mxu0 0.0
        %693 = vmatpush1.msra.mxu0 %v673
        %694 = vmatprep.subr.mxu0 0.0
        %695 = vmatpush1.msra.mxu0 %v674
        %696 = vmatprep.subr.mxu0 0.0
        %697 = vmatpush1.msra.mxu0 %v675
        %698 = vmatprep.subr.mxu0 0.0
        %699 = vmatpush1.msra.mxu0 %v676
        %700 = vmatprep.subr.mxu0 0.0
        %701 = vmatpush1.msra.mxu0 %v677
        %702 = vmatprep.subr.mxu0 0.0
        %703 = vmatpush1.msra.mxu0 %v678
        %704 = vmatprep.subr.mxu0 0.0
        %705 = vmatpush1.msra.mxu0 %v679
        %706 = vmatprep.subr.mxu0 0.0
        %707 = vmatpush1.msra.mxu0 %v680
        %708 = vmatprep.subr.mxu0 0.0
        %709 = vmatpush1.msra.mxu0 %v681
        %710 = vmatprep.subr.mxu0 0.0
        %711 = vmatpush1.msra.mxu0 %v682
        %712 = vmatprep.subr.mxu0 0.0
        %713 = vmatpush1.msra.mxu0 %v683
        %714 = vmatprep.subr.mxu0 0.0
        %715 = vmatpush1.msra.mxu0 %v684
        %716 = vmatprep.subr.mxu0 0.0
        %717 = vmatpush1.msra.mxu0 %v685
        %718 = vmatprep.subr.mxu0 0.0
        %719 = vmatpush1.msra.mxu0 %v686
        %720 = vmatprep.subr.mxu0 0.0
        %721 = vmatpush1.msra.mxu0 0.0
        %722 = vmatprep.subr.mxu0 0.0
        %723 = vmatpush1.msra.mxu0 0.0
        %724 = vmatprep.subr.mxu0 0.0
        %725 = vmatpush1.msra.mxu0 0.0
        %726 = vmatprep.subr.mxu0 0.0
        %727 = vmatpush1.msra.mxu0 0.0
        %728 = vmatprep.subr.mxu0 0.0
        %729 = vmatpush1.msra.mxu0 0.0
        %730 = vmatprep.subr.mxu0 0.0
        %731 = vmatpush1.msra.mxu0 0.0
        %732 = vmatprep.subr.mxu0 0.0
        %733 = vmatpush1.msra.mxu0 0.0
        %734 = vmatprep.subr.mxu0 0.0
        %735 = vmatpush1.msra.mxu0 0.0
        %736 = vmatprep.subr.mxu0 0.0
        %737 = vmatpush1.msra.mxu0 0.0
        %738 = vmatprep.subr.mxu0 0.0
        %739 = vmatpush1.msra.mxu0 0.0
        %740 = vmatprep.subr.mxu0 0.0
        %741 = vmatpush1.msra.mxu0 0.0
        %742 = vmatprep.subr.mxu0 0.0
        %743 = vmatpush1.msra.mxu0 0.0
        %744 = vmatprep.subr.mxu0 0.0
        %745 = vmatpush1.msra.mxu0 0.0
        %746 = vmatprep.subr.mxu0 0.0
        %747 = vmatpush1.msra.mxu0 0.0
        %748 = vmatprep.subr.mxu0 0.0
        %749 = vmatpush1.msra.mxu0 0.0
        %750 = vmatprep.subr.mxu0 0.0
        %751 = vmatpush1.msra.mxu0 0.0
        %752 = vmatprep.mubr.f32.mxu0 0.0
        %753 = vmatmul.mubr.f32.gmra.mrb[0].mxu0 %v667
        %v754 = vpop.f32.mrb[0].mxu0
        %v755 = vadd.f32 %v687, %v754
        %v756 = vpop.f32.mrb[0].mxu0
        %757 = vdwg.mxu0
        %v758 = vtanh.pop %v755
        %759 = vst [vmem:[%s357] sm:$0xff] %v758
        %s760 = sand.u32 %s173, 1
        %s761 = scalar_lea.sflag [#allocation4], %s760
        %s762 = sand.u32 %s173, 1
        %s763 = smul.addr %s762, 8
        %s764 = scalar_lea.vmem [#allocation3], %s763
        %s765 = sand.u32 %s29, 1
        %s766 = scalar_lea.sflag [#allocation6], %s765
        %s767 = sand.u32 %s201, 1
        %s768 = smul.addr %s767, 8
        %s769 = scalar_lea.vmem [#allocation5], %s768
        %s770 = sand.u32 %s29, 1
        %s771 = scalar_lea.sflag [#allocation6], %s770
        %s772 = sand.u32 %s229, 1
        %s773 = smul.addr %s772, 8
        %s774 = scalar_lea.vmem [#allocation7], %s773
        %s775 = sand.u32 %s257, 1
        %s776 = scalar_lea.sflag [#allocation9], %s775
        %s777 = sand.u32 %s257, 1
        %s778 = smul.addr %s777, 8
        %s779 = scalar_lea.vmem [#allocation8], %s778
        // Predicated region
        $region41: #{global_attention.1} parent=39 // pred_check
          %p780 = pneg %p183
        $region42: #{global_attention.1} parent=39 // pred_check_branch
          %782 = sbr.rel (%p780) target = $region44
        $region43: #{global_attention.1} parent=39 // pred_region
          %s784 = ssub.s32 128, 128
          %785 = vsyncadd %s761, %s784
          %s786 = sadd.s32 %s34, %s33
          %s787 = smul.addr %s786, 128
          %s788 = scalar_lea.hbm %s5, %s787
          %s790 = sshll.u32 %s764, 4
          %s791 = int_to_ptr.vmem [resolvable:$true] %s790
          %793 = dma.vmem_to_hbm [thread:$0]  %s791, 128, %s788, %s761
        $region44: #{global_attention.1} parent=39 // pred_fallthru
          _
        // Predicated region
        $region45: #{global_attention.1} parent=39 // pred_check
          %p794 = pneg %p211
        $region46: #{global_attention.1} parent=39 // pred_check_branch
          %796 = sbr.rel (%p794) target = $region48
        $region47: #{global_attention.1} parent=39 // pred_region
          %s798 = ssub.s32 128, 128
          %799 = vsyncadd %s766, %s798
          %s800 = sadd.s32 %s34, %s33
          %s801 = smul.addr %s800, 128
          %s802 = scalar_lea.hbm %s6, %s801
          %s804 = sshll.u32 %s769, 4
          %s805 = int_to_ptr.vmem [resolvable:$true] %s804
          %807 = dma.vmem_to_hbm [thread:$0]  %s805, 128, %s802, %s766
        $region48: #{global_attention.1} parent=39 // pred_fallthru
          _
        // Predicated region
        $region49: #{global_attention.1} parent=39 // pred_check
          %p808 = pneg %p239
        $region50: #{global_attention.1} parent=39 // pred_check_branch
          %810 = sbr.rel (%p808) target = $region52
        $region51: #{global_attention.1} parent=39 // pred_region
          %s812 = ssub.s32 128, 128
          %813 = vsyncadd %s771, %s812
          %s814 = sadd.s32 %s34, %s33
          %s815 = smul.addr %s814, 128
          %s816 = scalar_lea.hbm %s7, %s815
          %s818 = sshll.u32 %s774, 4
          %s819 = int_to_ptr.vmem [resolvable:$true] %s818
          %821 = dma.vmem_to_hbm [thread:$0]  %s819, 128, %s816, %s771
        $region52: #{global_attention.1} parent=39 // pred_fallthru
          _
        // Predicated region
        $region53: #{global_attention.1} parent=39 // pred_check
          %p822 = pneg %p267
        $region54: #{global_attention.1} parent=39 // pred_check_branch
          %824 = sbr.rel (%p822) target = $region56
        $region55: #{global_attention.1} parent=39 // pred_region
          %s826 = ssub.s32 128, 128
          %827 = vsyncadd %s776, %s826
          %s828 = sadd.s32 %s34, %s33
          %s829 = smul.addr %s828, 128
          %s830 = scalar_lea.hbm %s8, %s829
          %s832 = sshll.u32 %s779, 4
          %s833 = int_to_ptr.vmem [resolvable:$true] %s832
          %835 = dma.vmem_to_hbm [thread:$0]  %s833, 128, %s830, %s776
        $region56: #{global_attention.1} parent=39 // pred_fallthru
          _
      $region40: #{global_attention.1} parent=5 // pred_fallthru
        _
      %p836 = scmp.le.s32.totalorder 2, %s24
      // Predicated region
      $region57: #{global_attention.1} parent=5 // pred_check
        %p837 = pneg %p836
      $region58: #{global_attention.1} parent=5 // pred_check_branch
        %839 = sbr.rel (%p837) target = $region60
      $region59: #{global_attention.1} parent=5 // pred_region
        %s840 = ssub.s32 %s24, 2
        // Predicated region
        $region61: #{global_attention.1} parent=59 // pred_check
          %p841 = pneg %p189
        $region62: #{global_attention.1} parent=59 // pred_check_branch
          %843 = sbr.rel (%p841) target = $region64
        $region63: #{global_attention.1} parent=59 // pred_region
          %s844 = sand.u32 %s174, 1
          %s845 = scalar_lea.sflag [#allocation4], %s844
          %s846 = sand.u32 %s174, 1
          %s847 = smul.addr %s846, 8
          %s848 = scalar_lea.vmem [#allocation3], %s847
          %849 = dma.done %s845, 128
        $region64: #{global_attention.1} parent=59 // pred_fallthru
          _
        // Predicated region
        $region65: #{global_attention.1} parent=59 // pred_check
          %p850 = pneg %p217
        $region66: #{global_attention.1} parent=59 // pred_check_branch
          %852 = sbr.rel (%p850) target = $region68
        $region67: #{global_attention.1} parent=59 // pred_region
          %s853 = sand.u32 %s30, 1
          %s854 = scalar_lea.sflag [#allocation6], %s853
          %s855 = sand.u32 %s202, 1
          %s856 = smul.addr %s855, 8
          %s857 = scalar_lea.vmem [#allocation5], %s856
          %858 = dma.done %s854, 128
        $region68: #{global_attention.1} parent=59 // pred_fallthru
          _
        // Predicated region
        $region69: #{global_attention.1} parent=59 // pred_check
          %p859 = pneg %p245
        $region70: #{global_attention.1} parent=59 // pred_check_branch
          %861 = sbr.rel (%p859) target = $region72
        $region71: #{global_attention.1} parent=59 // pred_region
          %s862 = sand.u32 %s30, 1
          %s863 = scalar_lea.sflag [#allocation6], %s862
          %s864 = sand.u32 %s230, 1
          %s865 = smul.addr %s864, 8
          %s866 = scalar_lea.vmem [#allocation7], %s865
          %867 = dma.done %s863, 128
        $region72: #{global_attention.1} parent=59 // pred_fallthru
          _
        // Predicated region
        $region73: #{global_attention.1} parent=59 // pred_check
          %p868 = pneg %p273
        $region74: #{global_attention.1} parent=59 // pred_check_branch
          %870 = sbr.rel (%p868) target = $region76
        $region75: #{global_attention.1} parent=59 // pred_region
          %s871 = sand.u32 %s258, 1
          %s872 = scalar_lea.sflag [#allocation9], %s871
          %s873 = sand.u32 %s258, 1
          %s874 = smul.addr %s873, 8
          %s875 = scalar_lea.vmem [#allocation8], %s874
          %876 = dma.done %s872, 128
        $region76: #{global_attention.1} parent=59 // pred_fallthru
          _
      $region60: #{global_attention.1} parent=5 // pred_fallthru
        _
    $region6: #{global_attention.1} parent=1 // loop_footer
      %s28 = sadd.s32 1, %s24
    $region7: #{global_attention.1} parent=1 // loop_footer_branch
      %23 = sbr.rel target = $region3
    $region8: #{global_attention.1} parent=1 // loop_exit
      _
    %877 = vsyncpa [#allocation4], 1
    %s878 = scalar_lea.sflag [#allocation4], 1
    %879 = vsyncpa %s878, 1
    %880 = vsyncpa [#allocation6], 1
    %s881 = scalar_lea.sflag [#allocation6], 1
    %882 = vsyncpa %s881, 1
    %883 = vsyncpa [#allocation9], 1
    %s884 = scalar_lea.sflag [#allocation9], 1
    %885 = vsyncpa %s884, 1

</llo_original>
